<compile_context>
chip_gen: v7x
topology: tpu7x:2x2x1
jax: 0.10.0
libtpu: 0.0.40
codegen_flags: <defaults>
</compile_context>

<pallas_src>
import functools

import jax
import jax.numpy as jnp
import numpy as np
from jax.experimental import pallas as pl
from jax.experimental.pallas import tpu as pltpu


# --------------------------- shared MLP epilogue ---------------------------

def _bottleneck_mlp(pooled, w1, w2t, use_vpu):
    """sigmoid(relu(pooled @ w1.T) @ w2t) with pooled (Bb, C) in f32.

    w1  : (Chid, C)   fc1 weight, PyTorch (out, in) layout
    w2t : (Chid, C)   fc2 weight transposed to (in, out)
    """
    w1f = w1.astype(jnp.float32)
    w2f = w2t.astype(jnp.float32)
    if use_vpu:
        # Tiny hidden width: keep it off the MXU (no weight push / warm-up in
        # the cold epilogue).  Lane reduction + sublane reduction on VPU/XLU.
        h = jnp.maximum(
            jnp.sum(pooled[:, None, :] * w1f[None, :, :], axis=-1), 0.0)   # (Bb, Chid)
        z = jnp.sum(h[:, :, None] * w2f[None, :, :], axis=1)               # (Bb, C)
    else:
        h = jnp.maximum(
            jax.lax.dot_general(pooled, w1f, (((1,), (1,)), ((), ())),
                                preferred_element_type=jnp.float32), 0.0)   # (Bb, Chid)
        z = jnp.dot(h, w2f, preferred_element_type=jnp.float32)            # (Bb, C)
    return 1.0 / (1.0 + jnp.exp(-z))                                        # exp -> EUP


# ----------------------------- fused kernel --------------------------------

def _se_fused_kernel(x_ref, w1_ref, w2_ref, o_ref, *, mode, inv_count, use_vpu):
    """Single-read SE: pool + MLP + sigmoid + scale, one batch block per step.

      x_ref : (Bb, C, HWp)   lane-dense activations (HWp multiple of 128)
      w1_ref: (Chid, C)      fc1 weight
      w2_ref: (Chid, C)      fc2 weight transposed
      o_ref : (Bb, C, HWp)   x * scale
    """
    x = x_ref[...]                                   # stays in input dtype
    xf = x.astype(jnp.float32)
    if mode == "avg_pool":
        pooled = jnp.sum(xf, axis=-1) * inv_count    # (Bb, C), pad adds 0
    else:
        pooled = jnp.max(xf, axis=-1)                # pad is dtype-min
    s = _bottleneck_mlp(pooled, w1_ref[...], w2_ref[...], use_vpu)   # (Bb, C) f32
    # bf16-native multiply on v6e/v7x; f32 inputs stay f32 (v5e friendly).
    o_ref[...] = (x * s.astype(x.dtype)[:, :, None]).astype(o_ref.dtype)


# -------------------------- two-pass fallback kernels -----------------------

def _pool_mlp_kernel(x_ref, w1_ref, w2_ref, scale_ref, acc_ref, *,
                     mode, inv_count, use_vpu):
    """Global pool over spatial tiles + fused MLP/sigmoid epilogue.

    Grid = (B, n_tiles); spatial axis is a reduction ("arbitrary").
      x_ref    : (1, C, T)    scale_ref: (1, C, 1)    acc_ref: (1, C) f32
    """
    t = pl.program_id(1)

    @pl.when(t == 0)
    def _():
        if mode == "avg_pool":
            acc_ref[...] = jnp.zeros_like(acc_ref)
        else:
            acc_ref[...] = jnp.full_like(acc_ref, -jnp.inf)

    x = x_ref[...].astype(jnp.float32)               # (1, C, T)
    if mode == "avg_pool":
        acc_ref[...] += jnp.sum(x, axis=-1)
    else:
        acc_ref[...] = jnp.maximum(acc_ref[...], jnp.max(x, axis=-1))

    @pl.when(t == pl.num_programs(1) - 1)
    def _():
        pooled = acc_ref[...]
        if mode == "avg_pool":
            pooled = pooled * inv_count
        s = _bottleneck_mlp(pooled, w1_ref[...], w2_ref[...], use_vpu)
        scale_ref[...] = s[:, :, None].astype(scale_ref.dtype)


def _scale_kernel(x_ref, s_ref, o_ref):
    """out = x * scale;  x_ref (1, C, T), s_ref (1, C, 1), o_ref (1, C, T)."""
    x = x_ref[...]
    o_ref[...] = (x * s_ref[...].astype(x.dtype)).astype(o_ref.dtype)


# ------------------------------ sizing helpers ------------------------------

_MIB = 1 << 20


def _vmem_budgets():
    """(physical VMEM bytes, scoped limit to request)."""
    phys = 64 * _MIB                       # conservative default = v7x
    try:
        info = pltpu.get_tpu_info()
        phys = int(getattr(info, "vmem_capacity_bytes", phys))
    except Exception:
        pass
    # Raise the scoped limit but keep double-buffering headroom
    # (v7x: 48 MiB of 64; v5e/v6e: capped at 100 MiB of 128).
    limit = min((phys * 3) // 4, 100 * _MIB)
    return phys, limit


def _pick_spatial_tile(hwp, c, elt_bytes, budget_bytes):
    """Largest multiple-of-128 tile dividing hwp with c*tile*elt <= budget."""
    n128 = hwp // 128
    best = 128
    for d in range(1, n128 + 1):
        if n128 % d == 0:
            t = 128 * d
            if t * c * elt_bytes <= budget_bytes:
                best = max(best, t)
    return best


def _pick_batch_block(b, row_bytes, w_bytes, fused_budget):
    """Largest divisor Bb of B with ~4 MiB blocks and VMEM budget satisfied."""
    bb = 1
    for d in range(1, b + 1):
        if b % d == 0 and 4 * d * row_bytes + w_bytes <= fused_budget \
                and d * row_bytes <= 4 * _MIB:
            bb = d
    return bb


# --------------------------------- wrapper ----------------------------------

def se_layer_forward(x_nchw, w1, w2, *, mode="avg_pool", force_two_pass=False):
    """SELayer.forward.

      x_nchw: (B, C, H, W)
      w1    : (C//reduction, C)  fc1 weight (PyTorch (out, in), bias=False)
      w2    : (C, C//reduction)  fc2 weight (PyTorch (out, in), bias=False)
    Returns (B, C, H, W).
    """
    assert mode in ("avg_pool", "max_pool")
    B, C, H, W = x_nchw.shape
    HW = H * W
    Chid = w1.shape[0]
    elt = jnp.dtype(x_nchw.dtype).itemsize

    x_flat = x_nchw.reshape(B, C, HW)        # free reshape, lane-dense last dim

    # Pad spatial dim to a multiple of 128 lanes (unmasked vld/vst).
    HWp = ((HW + 127) // 128) * 128
    if HWp != HW:
        pad_val = 0.0 if mode == "avg_pool" else float(jnp.finfo(x_nchw.dtype).min)
        x_flat = jnp.pad(x_flat, ((0, 0), (0, 0), (0, HWp - HW)),
                         constant_values=pad_val)

    w2t = jnp.transpose(w2)                  # (Chid, C)
    use_vpu = Chid <= 8
    inv_count = 1.0 / HW                     # true count, padding adds zeros

    phys_vmem, vmem_limit = _vmem_budgets()
    fused_budget = min(phys_vmem // 2, 48 * _MIB)   # v7x-aware row-cache budget
    row_bytes = C * HWp * elt
    w_bytes = 2 * Chid * C * 4

    if (not force_two_pass) and (4 * row_bytes + w_bytes <= fused_budget):
        # ---------------- single-read fused path ----------------
        Bb = _pick_batch_block(B, row_bytes, w_bytes, fused_budget)
        out = pl.pallas_call(
            functools.partial(_se_fused_kernel, mode=mode,
                              inv_count=inv_count, use_vpu=use_vpu),
            out_shape=jax.ShapeDtypeStruct((B, C, HWp), x_nchw.dtype),
            grid=(B // Bb,),
            in_specs=[
                pl.BlockSpec((Bb, C, HWp), lambda b: (b, 0, 0)),
                pl.BlockSpec((Chid, C), lambda b: (0, 0)),   # weights resident
                pl.BlockSpec((Chid, C), lambda b: (0, 0)),
            ],
            out_specs=pl.BlockSpec((Bb, C, HWp), lambda b: (b, 0, 0)),
            compiler_params=pltpu.CompilerParams(
                dimension_semantics=("parallel",),
                vmem_limit_bytes=vmem_limit),
        )(x_flat, w1, w2t)
    else:
        # ---------------- two-pass fallback (rows too large for VMEM) -------
        tile = _pick_spatial_tile(HWp, C, elt, budget_bytes=2 * _MIB)
        n_tiles = HWp // tile

        scale = pl.pallas_call(
            functools.partial(_pool_mlp_kernel, mode=mode,
                              inv_count=inv_count, use_vpu=use_vpu),
            out_shape=jax.ShapeDtypeStruct((B, C, 1), jnp.float32),
            grid=(B, n_tiles),
            in_specs=[
                pl.BlockSpec((1, C, tile), lambda b, t: (b, 0, t)),
                pl.BlockSpec((Chid, C), lambda b, t: (0, 0)),
                pl.BlockSpec((Chid, C), lambda b, t: (0, 0)),
            ],
            out_specs=pl.BlockSpec((1, C, 1), lambda b, t: (b, 0, 0)),
            scratch_shapes=[pltpu.VMEM((1, C), jnp.float32)],
            compiler_params=pltpu.CompilerParams(
                dimension_semantics=("parallel", "arbitrary"),
                vmem_limit_bytes=vmem_limit),
        )(x_flat, w1, w2t)

        out = pl.pallas_call(
            _scale_kernel,
            out_shape=jax.ShapeDtypeStruct((B, C, HWp), x_nchw.dtype),
            grid=(B, n_tiles),
            in_specs=[
                pl.BlockSpec((1, C, tile), lambda b, t: (b, 0, t)),
                pl.BlockSpec((1, C, 1), lambda b, t: (b, 0, 0)),
            ],
            out_specs=pl.BlockSpec((1, C, tile), lambda b, t: (b, 0, t)),
            compiler_params=pltpu.CompilerParams(
                dimension_semantics=("parallel", "parallel"),
                vmem_limit_bytes=vmem_limit),
        )(x_flat, scale)

    if HWp != HW:
        out = out[:, :, :HW]
    return out.reshape(B, C, H, W)


# ----------------------- pure-JAX reference (sanity) ------------------------

def se_layer_ref(x, w1, w2, mode):
    if mode == "avg_pool":
        pooled = jnp.mean(x, axis=(2, 3))
    else:
        pooled = jnp.max(x, axis=(2, 3))
    h = jax.nn.relu(pooled @ w1.T)
    z = h @ w2.T
    s = 1.0 / (1.0 + jnp.exp(-z))
    return x * s[:, :, None, None]


# ----------------------------------- main -----------------------------------

if __name__ == "__main__":
    key = jax.random.PRNGKey(0)

    def make_inputs(B, C, H, W, reduction):
        Chid = max(C // reduction, 1)
        kx, k1, k2 = jax.random.split(jax.random.fold_in(key, C * H * W), 3)
        x = jax.random.normal(kx, (B, C, H, W), jnp.float32)
        w1 = 0.5 * jax.random.normal(k1, (Chid, C), jnp.float32)   # fc1 (out, in)
        w2 = 0.5 * jax.random.normal(k2, (C, Chid), jnp.float32)   # fc2 (out, in)
        return x, w1, w2

    def check(x, w1, w2, mode, force_two_pass):
        fwd = jax.jit(functools.partial(se_layer_forward, mode=mode,
                                        force_two_pass=force_two_pass))
        out = jax.block_until_ready(fwd(x, w1, w2))
        ref = jax.block_until_ready(se_layer_ref(x, w1, w2, mode))
        assert out.shape == x.shape
        np.testing.assert_allclose(np.asarray(out), np.asarray(ref),
                                   rtol=1e-5, atol=1e-5)

    # channel=32 with the module's default reduction=16 -> hidden=2
    x0, w1_0, w2_0 = make_inputs(2, 32, 16, 16, 16)     # HW = 256 (128-aligned)
    x1, w1_1, w2_1 = make_inputs(2, 32, 10, 10, 16)     # HW = 100 (needs padding)

    for mode in ("avg_pool", "max_pool"):
        check(x0, w1_0, w2_0, mode, force_two_pass=False)   # fused single-read
        check(x1, w1_1, w2_1, mode, force_two_pass=False)   # fused + lane padding
        check(x0, w1_0, w2_0, mode, force_two_pass=True)    # two-pass fallback

    print("KERNEL_OK")
</pallas_src>

<mosaic_0001>
module attributes {stable_mosaic.version = 11 : i64} {
  func.func @_se_fused_kernel(%arg0: i32, %arg1: memref<2x32x256xf32, #tpu.memory_space<vmem>>, %arg2: memref<2x32xf32, #tpu.memory_space<vmem>>, %arg3: memref<2x32xf32, #tpu.memory_space<vmem>>, %arg4: memref<2x32x256xf32, #tpu.memory_space<vmem>>) attributes {dimension_semantics = [#tpu.dimension_semantics<parallel>], iteration_bounds = array<i64: 1>, scalar_prefetch = 0 : i64, scratch_operands = 0 : i64, tpu.core_type = #tpu.core_type<tc>, window_params = [{transform_indices = @transform_0, window_bounds = array<i64: 2, 32, 256>}, {pipeline_mode = #tpu.pipeline_mode<synchronous>, transform_indices = @transform_1, window_bounds = array<i64: 2, 32>}, {pipeline_mode = #tpu.pipeline_mode<synchronous>, transform_indices = @transform_2, window_bounds = array<i64: 2, 32>}, {transform_indices = @transform_3, window_bounds = array<i64: 2, 32, 256>}]} {
    %c0 = arith.constant 0 : index
    %c0_0 = arith.constant 0 : index
    %c0_1 = arith.constant 0 : index
    %0 = vector.load %arg1[%c0, %c0_0, %c0_1] : memref<2x32x256xf32, #tpu.memory_space<vmem>>, vector<2x32x256xf32>
    %cst = arith.constant dense<0.000000e+00> : vector<2x32xf32>
    %1 = vector.multi_reduction <add>, %0, %cst [2] : vector<2x32x256xf32> to vector<2x32xf32>
    %cst_2 = arith.constant 3.906250e-03 : f32
    %2 = vector.broadcast %cst_2 : f32 to vector<2x32xf32>
    %3 = arith.mulf %1, %2 : vector<2x32xf32>
    %c0_3 = arith.constant 0 : index
    %c0_4 = arith.constant 0 : index
    %4 = vector.load %arg2[%c0_3, %c0_4] : memref<2x32xf32, #tpu.memory_space<vmem>>, vector<2x32xf32>
    %c0_5 = arith.constant 0 : index
    %c0_6 = arith.constant 0 : index
    %5 = vector.load %arg3[%c0_5, %c0_6] : memref<2x32xf32, #tpu.memory_space<vmem>>, vector<2x32xf32>
    %6 = vector.shape_cast %3 : vector<2x32xf32> to vector<2x1x32xf32>
    %7 = vector.shape_cast %4 : vector<2x32xf32> to vector<1x2x32xf32>
    %8 = vector.broadcast %6 : vector<2x1x32xf32> to vector<2x2x32xf32>
    %9 = vector.broadcast %7 : vector<1x2x32xf32> to vector<2x2x32xf32>
    %10 = arith.mulf %8, %9 : vector<2x2x32xf32>
    %cst_7 = arith.constant dense<0.000000e+00> : vector<2x2xf32>
    %11 = vector.multi_reduction <add>, %10, %cst_7 [2] : vector<2x2x32xf32> to vector<2x2xf32>
    %cst_8 = arith.constant 0.000000e+00 : f32
    %12 = vector.broadcast %cst_8 : f32 to vector<2x2xf32>
    %13 = arith.maximumf %11, %12 : vector<2x2xf32>
    %14 = vector.shape_cast %13 : vector<2x2xf32> to vector<2x2x1xf32>
    %15 = vector.shape_cast %5 : vector<2x32xf32> to vector<1x2x32xf32>
    %16 = vector.broadcast %14 : vector<2x2x1xf32> to vector<2x2x32xf32>
    %17 = vector.broadcast %15 : vector<1x2x32xf32> to vector<2x2x32xf32>
    %18 = arith.mulf %16, %17 : vector<2x2x32xf32>
    %cst_9 = arith.constant dense<0.000000e+00> : vector<2x32xf32>
    %19 = vector.multi_reduction <add>, %18, %cst_9 [1] : vector<2x2x32xf32> to vector<2x32xf32>
    %cst_10 = arith.constant 0.000000e+00 : f32
    %20 = vector.broadcast %cst_10 : f32 to vector<2x32xf32>
    %21 = arith.subf %20, %19 : vector<2x32xf32>
    %22 = math.exp %21 : vector<2x32xf32>
    %cst_11 = arith.constant 1.000000e+00 : f32
    %23 = vector.broadcast %cst_11 : f32 to vector<2x32xf32>
    %24 = arith.addf %23, %22 : vector<2x32xf32>
    %cst_12 = arith.constant 1.000000e+00 : f32
    %25 = vector.broadcast %cst_12 : f32 to vector<2x32xf32>
    %26 = arith.divf %25, %24 : vector<2x32xf32>
    %27 = vector.shape_cast %26 : vector<2x32xf32> to vector<2x32x1xf32>
    %28 = vector.broadcast %27 : vector<2x32x1xf32> to vector<2x32x256xf32>
    %29 = arith.mulf %0, %28 : vector<2x32x256xf32>
    %c0_13 = arith.constant 0 : index
    %c0_14 = arith.constant 0 : index
    %c0_15 = arith.constant 0 : index
    %30 = vector.load %arg4[%c0_13, %c0_14, %c0_15] : memref<2x32x256xf32, #tpu.memory_space<vmem>>, vector<2x32x256xf32>
    tpu.vector_store %arg4[%c0_13, %c0_14, %c0_15], %29 {strides = array<i32>} : memref<2x32x256xf32, #tpu.memory_space<vmem>>, vector<2x32x256xf32>,
    return
  }
  func.func @transform_0(%arg0: i32) -> (i32, i32, i32) {
    %c0_i32 = arith.constant 0 : i32
    %c0_i32_0 = arith.constant 0 : i32
    %c0_i32_1 = arith.constant 0 : i32
    return %arg0, %c0_i32, %c0_i32_0 : i32, i32, i32
  }
  func.func @transform_1(%arg0: i32) -> (i32, i32) {
    %c0_i32 = arith.constant 0 : i32
    %c0_i32_0 = arith.constant 0 : i32
    %c0_i32_1 = arith.constant 0 : i32
    return %c0_i32, %c0_i32_0 : i32, i32
  }
  func.func @transform_2(%arg0: i32) -> (i32, i32) {
    %c0_i32 = arith.constant 0 : i32
    %c0_i32_0 = arith.constant 0 : i32
    %c0_i32_1 = arith.constant 0 : i32
    return %c0_i32, %c0_i32_0 : i32, i32
  }
  func.func @transform_3(%arg0: i32) -> (i32, i32, i32) {
    %c0_i32 = arith.constant 0 : i32
    %c0_i32_0 = arith.constant 0 : i32
    %c0_i32_1 = arith.constant 0 : i32
    return %arg0, %c0_i32, %c0_i32_0 : i32, i32, i32
  }
}

</mosaic_0001>

<llo_original>
// kernel: se_layer_forward.1
$region0: #{se_layer_forward.1}
  #allocation0 [shape = 'u32[]', space=smem, size = 0x4, offset = 0x4, fixed_abs, tag = 'smem constant byte address 0x4 - core index']
  #allocation1 [shape = 'u32[144,128]{1,0:T(1,128)}', space=vmem, size = 0x12000, scoped, tag = 'internal scratch']
  %s0 = inlined_call_operand.vmem [shape: f32[2,32,256], index: 0, kind: input, shape index: {}]
  %s1 = inlined_call_operand.vmem [shape: f32[2,32], index: 1, kind: input, shape index: {}]
  %s2 = inlined_call_operand.vmem [shape: f32[2,32], index: 2, kind: input, shape index: {}]
  %s3 = inlined_call_operand.vmem [shape: f32[2,32,256], index: 3, kind: output, shape index: {}]
  %s4 = sld [smem:[#allocation0]]
  $region22: #{se_layer_forward.1} parent=0
    _
  %s6 = ssub.s32 1, %s4
  %s7 = scalar_select 0, %s6, %s4
  // Predicated region
  $region2: #{se_layer_forward.1} parent=0 // pred_check
    _
  $region3: #{se_layer_forward.1} parent=0 // pred_check_branch
    %9 = sbr.rel (0) target = $region5
  $region4: #{se_layer_forward.1} parent=0 // pred_region
    _
  $region5: #{se_layer_forward.1} parent=0 // pred_fallthru
    _
  // Predicated region
  $region6: #{se_layer_forward.1} parent=0 // pred_check
    _
  $region7: #{se_layer_forward.1} parent=0 // pred_check_branch
    %11 = sbr.rel (0) target = $region9
  $region8: #{se_layer_forward.1} parent=0 // pred_region
    _
  $region9: #{se_layer_forward.1} parent=0 // pred_fallthru
    _
  // Predicated region
  $region10: #{se_layer_forward.1} parent=0 // pred_check
    _
  $region11: #{se_layer_forward.1} parent=0 // pred_check_branch
    %13 = sbr.rel (0) target = $region13
  $region12: #{se_layer_forward.1} parent=0 // pred_region
    _
  $region13: #{se_layer_forward.1} parent=0 // pred_fallthru
    _
  %v14 = vld [vmem:[%s0] sm:$0xff]
  %v15 = vld [vmem:[%s0 + $0x8] sm:$0xff]
  %v16 = vld [vmem:[%s0 + $0x10] sm:$0xff]
  %v17 = vld [vmem:[%s0 + $0x18] sm:$0xff]
  %v18 = vld [vmem:[%s0 + $0x20] sm:$0xff]
  %v19 = vld [vmem:[%s0 + $0x28] sm:$0xff]
  %v20 = vld [vmem:[%s0 + $0x30] sm:$0xff]
  %v21 = vld [vmem:[%s0 + $0x38] sm:$0xff]
  %v22 = vld [vmem:[%s0 + $0x40] sm:$0xff]
  %v23 = vld [vmem:[%s0 + $0x48] sm:$0xff]
  %v24 = vld [vmem:[%s0 + $0x50] sm:$0xff]
  %v25 = vld [vmem:[%s0 + $0x58] sm:$0xff]
  %v26 = vld [vmem:[%s0 + $0x60] sm:$0xff]
  %v27 = vld [vmem:[%s0 + $0x68] sm:$0xff]
  %v28 = vld [vmem:[%s0 + $0x70] sm:$0xff]
  %v29 = vld [vmem:[%s0 + $0x78] sm:$0xff]
  %v30 = vadd.f32 %v14, %v15
  %31 = vadd.xlane.f32.xlu0 %v30
  %v32 = vpop.xlane.xlu0 %31
  %v33 = vadd.f32 %v16, %v17
  %34 = vadd.xlane.f32.xlu0 %v33
  %v35 = vpop.xlane.xlu0 %34
  %v36 = vadd.f32 %v18, %v19
  %37 = vadd.xlane.f32.xlu0 %v36
  %v38 = vpop.xlane.xlu0 %37
  %v39 = vadd.f32 %v20, %v21
  %40 = vadd.xlane.f32.xlu0 %v39
  %v41 = vpop.xlane.xlu0 %40
  %v42 = vadd.f32 %v22, %v23
  %43 = vadd.xlane.f32.xlu0 %v42
  %v44 = vpop.xlane.xlu0 %43
  %v45 = vadd.f32 %v24, %v25
  %46 = vadd.xlane.f32.xlu0 %v45
  %v47 = vpop.xlane.xlu0 %46
  %v48 = vadd.f32 %v26, %v27
  %49 = vadd.xlane.f32.xlu0 %v48
  %v50 = vpop.xlane.xlu0 %49
  %v51 = vadd.f32 %v28, %v29
  %52 = vadd.xlane.f32.xlu0 %v51
  %v53 = vpop.xlane.xlu0 %52
  %v54 = vmul.f32 %v32, 0.00390625
  %v55 = vmul.f32 %v35, 0.00390625
  %v56 = vmul.f32 %v38, 0.00390625
  %v57 = vmul.f32 %v41, 0.00390625
  %v58 = vmul.f32 %v44, 0.00390625
  %v59 = vmul.f32 %v47, 0.00390625
  %v60 = vmul.f32 %v50, 0.00390625
  %v61 = vmul.f32 %v53, 0.00390625
  %v62 = vld [vmem:[%s1] sm:$0x3]
  %v63 = vld [vmem:[%s2] sm:$0x3]
  %v65 = vlaneseq
  %v66 = vshrl.u32 %v65, 7
  %v67 = vsub.s32 0, %v66
  %v68 = vrot.slane %v62, %v67
  %70 = vbcast.lane.b32.xlu0 %v68, 256
  %v71 = vpop.permute.xlu0 %70
  %s73 = sor.u32 256, 8
  %74 = vbcast.lane.b32.xlu0 %v68, %s73
  %v75 = vpop.permute.xlu0 %74
  %s77 = sor.u32 256, 16
  %78 = vbcast.lane.b32.xlu0 %v68, %s77
  %v79 = vpop.permute.xlu0 %78
  %s81 = sor.u32 256, 24
  %82 = vbcast.lane.b32.xlu0 %v68, %s81
  %v83 = vpop.permute.xlu0 %82
  %v84 = vlaneseq
  %v85 = vshrl.u32 %v84, 7
  %v86 = vsub.s32 1, %v85
  %v87 = vrot.slane %v62, %v86
  %89 = vbcast.lane.b32.xlu0 %v87, 256
  %v90 = vpop.permute.xlu0 %89
  %s92 = sor.u32 256, 8
  %93 = vbcast.lane.b32.xlu0 %v87, %s92
  %v94 = vpop.permute.xlu0 %93
  %s96 = sor.u32 256, 16
  %97 = vbcast.lane.b32.xlu0 %v87, %s96
  %v98 = vpop.permute.xlu0 %97
  %s100 = sor.u32 256, 24
  %101 = vbcast.lane.b32.xlu0 %v87, %s100
  %v102 = vpop.permute.xlu0 %101
  %v111 = vmul.f32 %v54, %v71
  %v112 = vmul.f32 %v55, %v75
  %v113 = vmul.f32 %v56, %v79
  %v114 = vmul.f32 %v57, %v83
  %v115 = vmul.f32 %v54, %v90
  %v116 = vmul.f32 %v55, %v94
  %v117 = vmul.f32 %v56, %v98
  %v118 = vmul.f32 %v57, %v102
  %v119 = vmul.f32 %v58, %v71
  %v120 = vmul.f32 %v59, %v75
  %v121 = vmul.f32 %v60, %v79
  %v122 = vmul.f32 %v61, %v83
  %v123 = vmul.f32 %v58, %v90
  %v124 = vmul.f32 %v59, %v94
  %v125 = vmul.f32 %v60, %v98
  %v126 = vmul.f32 %v61, %v102
  %143 = vset.pattern.permute.xlu0 0
  %144 = vperm.xlu0 %143, %v111
  %v145 = vpop.permute.xlu0 %144
  %146 = vset.pattern.permute.xlu0 0
  %147 = vperm.xlu0 %146, %v112
  %v148 = vpop.permute.xlu0 %147
  %149 = vset.pattern.permute.xlu0 0
  %150 = vperm.xlu0 %149, %v113
  %v151 = vpop.permute.xlu0 %150
  %152 = vset.pattern.permute.xlu0 0
  %153 = vperm.xlu0 %152, %v114
  %v154 = vpop.permute.xlu0 %153
  %155 = vset.pattern.permute.xlu0 0
  %156 = vperm.xlu0 %155, %v115
  %v157 = vpop.permute.xlu0 %156
  %158 = vset.pattern.permute.xlu0 0
  %159 = vperm.xlu0 %158, %v116
  %v160 = vpop.permute.xlu0 %159
  %161 = vset.pattern.permute.xlu0 0
  %162 = vperm.xlu0 %161, %v117
  %v163 = vpop.permute.xlu0 %162
  %164 = vset.pattern.permute.xlu0 0
  %165 = vperm.xlu0 %164, %v118
  %v166 = vpop.permute.xlu0 %165
  %167 = vset.pattern.permute.xlu0 0
  %168 = vperm.xlu0 %167, %v119
  %v169 = vpop.permute.xlu0 %168
  %170 = vset.pattern.permute.xlu0 0
  %171 = vperm.xlu0 %170, %v120
  %v172 = vpop.permute.xlu0 %171
  %173 = vset.pattern.permute.xlu0 0
  %174 = vperm.xlu0 %173, %v121
  %v175 = vpop.permute.xlu0 %174
  %176 = vset.pattern.permute.xlu0 0
  %177 = vperm.xlu0 %176, %v122
  %v178 = vpop.permute.xlu0 %177
  %179 = vset.pattern.permute.xlu0 0
  %180 = vperm.xlu0 %179, %v123
  %v181 = vpop.permute.xlu0 %180
  %182 = vset.pattern.permute.xlu0 0
  %183 = vperm.xlu0 %182, %v124
  %v184 = vpop.permute.xlu0 %183
  %185 = vset.pattern.permute.xlu0 0
  %186 = vperm.xlu0 %185, %v125
  %v187 = vpop.permute.xlu0 %186
  %188 = vset.pattern.permute.xlu0 0
  %189 = vperm.xlu0 %188, %v126
  %v190 = vpop.permute.xlu0 %189
  %v191 = vlaneseq
  %v192 = vand.u32 %v191, 127
  %v193 = vlaneseq
  %v194 = vshrl.u32 %v193, 7
  %v195 = vsub.s32 %v192, %v194
  %v196 = vrot.slane %v145, %v195
  %v197 = vadd.s32 %v192, 4294967288
  %v198 = vlaneseq
  %v199 = vshrl.u32 %v198, 7
  %v200 = vsub.s32 %v197, %v199
  %v201 = vrot.slane %v148, %v200
  %vm202 = vcmask 130112
  %v203 = vsel %vm202, %v201, %v196
  %v204 = vadd.s32 %v192, 4294967280
  %v205 = vlaneseq
  %v206 = vshrl.u32 %v205, 7
  %v207 = vsub.s32 %v204, %v206
  %v208 = vrot.slane %v151, %v207
  %vm209 = vcmask 195712
  %v210 = vsel %vm209, %v208, %v203
  %v211 = vadd.s32 %v192, 4294967272
  %v212 = vlaneseq
  %v213 = vshrl.u32 %v212, 7
  %v214 = vsub.s32 %v211, %v213
  %v215 = vrot.slane %v154, %v214
  %vm216 = vcmask 261312
  %v217 = vsel %vm216, %v215, %v210
  %v218 = vlaneseq
  %v219 = vshrl.u32 %v218, 7
  %v220 = vsub.s32 %v192, %v219
  %v221 = vrot.slane %v157, %v220
  %v222 = vlaneseq
  %v223 = vshrl.u32 %v222, 7
  %v224 = vsub.s32 %v197, %v223
  %v225 = vrot.slane %v160, %v224
  %v226 = vsel %vm202, %v225, %v221
  %v227 = vlaneseq
  %v228 = vshrl.u32 %v227, 7
  %v229 = vsub.s32 %v204, %v228
  %v230 = vrot.slane %v163, %v229
  %v231 = vsel %vm209, %v230, %v226
  %v232 = vlaneseq
  %v233 = vshrl.u32 %v232, 7
  %v234 = vsub.s32 %v211, %v233
  %v235 = vrot.slane %v166, %v234
  %v236 = vsel %vm216, %v235, %v231
  %v237 = vlaneseq
  %v238 = vshrl.u32 %v237, 7
  %v239 = vsub.s32 %v192, %v238
  %v240 = vrot.slane %v169, %v239
  %v241 = vlaneseq
  %v242 = vshrl.u32 %v241, 7
  %v243 = vsub.s32 %v197, %v242
  %v244 = vrot.slane %v172, %v243
  %v245 = vsel %vm202, %v244, %v240
  %v246 = vlaneseq
  %v247 = vshrl.u32 %v246, 7
  %v248 = vsub.s32 %v204, %v247
  %v249 = vrot.slane %v175, %v248
  %v250 = vsel %vm209, %v249, %v245
  %v251 = vlaneseq
  %v252 = vshrl.u32 %v251, 7
  %v253 = vsub.s32 %v211, %v252
  %v254 = vrot.slane %v178, %v253
  %v255 = vsel %vm216, %v254, %v250
  %v256 = vlaneseq
  %v257 = vshrl.u32 %v256, 7
  %v258 = vsub.s32 %v192, %v257
  %v259 = vrot.slane %v181, %v258
  %v260 = vlaneseq
  %v261 = vshrl.u32 %v260, 7
  %v262 = vsub.s32 %v197, %v261
  %v263 = vrot.slane %v184, %v262
  %v264 = vsel %vm202, %v263, %v259
  %v265 = vlaneseq
  %v266 = vshrl.u32 %v265, 7
  %v267 = vsub.s32 %v204, %v266
  %v268 = vrot.slane %v187, %v267
  %v269 = vsel %vm209, %v268, %v264
  %v270 = vlaneseq
  %v271 = vshrl.u32 %v270, 7
  %v272 = vsub.s32 %v211, %v271
  %v273 = vrot.slane %v190, %v272
  %v274 = vsel %vm216, %v273, %v269
  %vm275 = vcmask 1041409
  %v276 = vsel %vm275, %v236, %v217
  %v277 = vsel %vm275, %v274, %v255
  %vm280 = vcmask 254976
  %v281 = vsel %vm280, %v276, 0.0
  %282 = vadd.xlane.f32.xlu0 %v281
  %v283 = vpop.xlane.xlu0 %282
  %v284 = vsel %vm280, %v277, 0.0
  %285 = vadd.xlane.f32.xlu0 %v284
  %v286 = vpop.xlane.xlu0 %285
  %v287 = vmax.f32 %v283, 0.0
  %v288 = vmax.f32 %v286, 0.0
  %v289 = vmul.f32 %v287, %v63
  %v290 = vmul.f32 %v288, %v63
  %v291 = vsel %vm280, %v289, 0.0
  %v292 = vrot.slane %v291, 4
  %v293 = vadd.f32 %v291, %v292
  %v294 = vrot.slane %v293, 2
  %v295 = vadd.f32 %v293, %v294
  %v296 = vrot.slane %v295, 1
  %v297 = vadd.f32 %v295, %v296
  %v298 = vsel %vm280, %v290, 0.0
  %v299 = vrot.slane %v298, 4
  %v300 = vadd.f32 %v298, %v299
  %v301 = vrot.slane %v300, 2
  %v302 = vadd.f32 %v300, %v301
  %v303 = vrot.slane %v302, 1
  %v304 = vadd.f32 %v302, %v303
  %v305 = vsub.f32 0.0, %v297
  %v306 = vsub.f32 0.0, %v304
  %v307 = vmul.f32 %v305, 1.442695
  %v308 = vpow.pop %v307
  %v309 = vmul.f32 %v306, 1.442695
  %v310 = vpow.pop %v309
  %v311 = vadd.f32 %v308, 1.0
  %v312 = vadd.f32 %v310, 1.0
  %v313 = vrcp.pop %v311
  %v314 = vmul.f32 1.0, %v313
  %v315 = vrcp.pop %v312
  %v316 = vmul.f32 1.0, %v315
  %318 = vbcast.lane.b32.xlu0 %v314, 256
  %v319 = vpop.permute.xlu0 %318
  %s321 = sor.u32 256, 8
  %322 = vbcast.lane.b32.xlu0 %v314, %s321
  %v323 = vpop.permute.xlu0 %322
  %s325 = sor.u32 256, 16
  %326 = vbcast.lane.b32.xlu0 %v314, %s325
  %v327 = vpop.permute.xlu0 %326
  %s329 = sor.u32 256, 24
  %330 = vbcast.lane.b32.xlu0 %v314, %s329
  %v331 = vpop.permute.xlu0 %330
  %333 = vbcast.lane.b32.xlu0 %v316, 256
  %v334 = vpop.permute.xlu0 %333
  %s336 = sor.u32 256, 8
  %337 = vbcast.lane.b32.xlu0 %v316, %s336
  %v338 = vpop.permute.xlu0 %337
  %s340 = sor.u32 256, 16
  %341 = vbcast.lane.b32.xlu0 %v316, %s340
  %v342 = vpop.permute.xlu0 %341
  %s344 = sor.u32 256, 24
  %345 = vbcast.lane.b32.xlu0 %v316, %s344
  %v346 = vpop.permute.xlu0 %345
  %v347 = vmul.f32 %v14, %v319
  %v348 = vmul.f32 %v15, %v319
  %v349 = vmul.f32 %v16, %v323
  %v350 = vmul.f32 %v17, %v323
  %v351 = vmul.f32 %v18, %v327
  %v352 = vmul.f32 %v19, %v327
  %v353 = vmul.f32 %v20, %v331
  %v354 = vmul.f32 %v21, %v331
  %v355 = vmul.f32 %v22, %v334
  %v356 = vmul.f32 %v23, %v334
  %v357 = vmul.f32 %v24, %v338
  %v358 = vmul.f32 %v25, %v338
  %v359 = vmul.f32 %v26, %v342
  %v360 = vmul.f32 %v27, %v342
  %v361 = vmul.f32 %v28, %v346
  %v362 = vmul.f32 %v29, %v346
  %363 = vst [vmem:[%s3] sm:$0xff] %v347
  %364 = vst [vmem:[%s3 + $0x8] sm:$0xff] %v348
  %365 = vst [vmem:[%s3 + $0x10] sm:$0xff] %v349
  %366 = vst [vmem:[%s3 + $0x18] sm:$0xff] %v350
  %367 = vst [vmem:[%s3 + $0x20] sm:$0xff] %v351
  %368 = vst [vmem:[%s3 + $0x28] sm:$0xff] %v352
  %369 = vst [vmem:[%s3 + $0x30] sm:$0xff] %v353
  %370 = vst [vmem:[%s3 + $0x38] sm:$0xff] %v354
  %371 = vst [vmem:[%s3 + $0x40] sm:$0xff] %v355
  %372 = vst [vmem:[%s3 + $0x48] sm:$0xff] %v356
  %373 = vst [vmem:[%s3 + $0x50] sm:$0xff] %v357
  %374 = vst [vmem:[%s3 + $0x58] sm:$0xff] %v358
  %375 = vst [vmem:[%s3 + $0x60] sm:$0xff] %v359
  %376 = vst [vmem:[%s3 + $0x68] sm:$0xff] %v360
  %377 = vst [vmem:[%s3 + $0x70] sm:$0xff] %v361
  %378 = vst [vmem:[%s3 + $0x78] sm:$0xff] %v362
  // Predicated region
  $region14: #{se_layer_forward.1} parent=0 // pred_check
    _
  $region15: #{se_layer_forward.1} parent=0 // pred_check_branch
    %380 = sbr.rel (0) target = $region17
  $region16: #{se_layer_forward.1} parent=0 // pred_region
    _
  $region17: #{se_layer_forward.1} parent=0 // pred_fallthru
    _
  // Predicated region
  $region18: #{se_layer_forward.1} parent=0 // pred_check
    _
  $region19: #{se_layer_forward.1} parent=0 // pred_check_branch
    %382 = sbr.rel (0) target = $region21
  $region20: #{se_layer_forward.1} parent=0 // pred_region
    _
  $region21: #{se_layer_forward.1} parent=0 // pred_fallthru
    _

</llo_original>
